<compile_context>
chip_gen: v7x
topology: tpu7x:2x2x1
jax: 0.10.0
libtpu: 0.0.40
codegen_flags: <defaults>
</compile_context>

<pallas_src>
import functools

import jax
import jax.numpy as jnp
from jax.experimental import pallas as pl
from jax.experimental.pallas import tpu as pltpu


def _pool_sum_kernel(*refs, height, inv_hw):
    """Accumulate mean over HW of (sum over branches) into a resident (1,C,1) block."""
    x_refs = refs[:height]          # each (1, C, T)
    o_ref = refs[height]            # (1, C, 1) f32, resident across the tile axis

    t = pl.program_id(1)

    @pl.when(t == 0)
    def _():
        o_ref[...] = jnp.zeros_like(o_ref)

    acc = jnp.zeros((o_ref.shape[1], 1), jnp.float32)
    for h in range(height):                                   # stream branches
        x = x_refs[h][0].astype(jnp.float32)                  # (C, T)
        acc = acc + jnp.sum(x, axis=-1, keepdims=True)        # (C, 1) lane reduce
    o_ref[0] += acc

    # Scale once, on the final tile only (output stays resident until then).
    @pl.when(t == pl.num_programs(1) - 1)
    def _():
        o_ref[...] = o_ref[...] * inv_hw


def _weighted_sum_kernel(*refs, height):
    """out = sum_h x_h * attn_h, tiled over HW."""
    attn_ref = refs[0]                       # (1, C, height) f32
    x_refs = refs[1:1 + height]              # each (1, C, T)
    o_ref = refs[1 + height]                 # (1, C, T)

    a = attn_ref[0]                                          # (C, height)
    acc = x_refs[0][0].astype(jnp.float32) * a[:, 0:1]       # (C, T)
    for h in range(1, height):
        acc = acc + x_refs[h][0].astype(jnp.float32) * a[:, h:h + 1]
    o_ref[0] = acc.astype(o_ref.dtype)


def _pick_hw_tile(hw, c, n_streams, itemsize,
                  vmem_budget=24 * 1024 * 1024, lane_cap=16384):
    """Largest multiple of 128 dividing hw that keeps double-buffered streams
    inside the VMEM budget (safe for v7x's 64 MiB scratchpad)."""
    if hw % 128 != 0:
        # Full extent is always a legal block shape (equals the array dim).
        # TODO(synk): pad/mask HW to a multiple of 128 for very large odd sizes.
        return hw
    per_lane_bytes = 2 * n_streams * c * itemsize          # 2 = double buffer
    cap = max(128, min(lane_cap, (vmem_budget // per_lane_bytes) // 128 * 128))
    best = 128
    t = 128
    while t <= min(hw, cap):
        if hw % t == 0:
            best = t
        t += 128
    return best


def skfusion_pallas(in_feats, w1, w2):
    """in_feats: list of `height` arrays, each (B, C, H, W).
       w1: (d, C) weight of Conv2d(dim, d, 1, bias=False)
       w2: (height*C, d) weight of Conv2d(d, dim*height, 1, bias=False)"""
    height = len(in_feats)
    B, C, H, W = in_feats[0].shape
    HW = H * W
    dtype = in_feats[0].dtype

    # Free reshapes (contiguous) -- no stacked copy of the inputs.
    xs = [f.reshape(B, C, HW) for f in in_feats]

    itemsize = jnp.dtype(dtype).itemsize
    # Size the tile for the heavier pass (height inputs + 1 output streamed).
    tile = _pick_hw_tile(HW, C, height + 1, itemsize)
    n_t = HW // tile

    vmem_limit = 32 * 1024 * 1024

    # ---- Pass 1: pooled[b, c] = mean_HW( sum_h x_h[b, c, :] ) ----
    pool_kernel = functools.partial(_pool_sum_kernel, height=height,
                                    inv_hw=1.0 / float(HW))
    pooled = pl.pallas_call(
        pool_kernel,
        out_shape=jax.ShapeDtypeStruct((B, C, 1), jnp.float32),
        grid_spec=pltpu.PrefetchScalarGridSpec(
            num_scalar_prefetch=0,
            grid=(B, n_t),
            in_specs=[pl.BlockSpec((1, C, tile), lambda b, t: (b, 0, t))
                      for _ in range(height)],
            out_specs=pl.BlockSpec((1, C, 1), lambda b, t: (b, 0, 0)),
        ),
        compiler_params=pltpu.CompilerParams(
            dimension_semantics=("parallel", "arbitrary"),
            vmem_limit_bytes=vmem_limit),
    )(*xs)

    # ---- Tiny MLP + softmax, batched over B in XLA (no N=1 MXU matvecs) ----
    pooled2 = pooled[:, :, 0]                                      # (B, C)
    hidden = jnp.maximum(pooled2 @ w1.T.astype(jnp.float32), 0.0)  # (B, d)
    logits = hidden @ w2.T.astype(jnp.float32)                     # (B, height*C)
    attn = jax.nn.softmax(logits.reshape(B, height, C), axis=1)    # (B, height, C)
    attn_t = jnp.transpose(attn, (0, 2, 1)).astype(jnp.float32)    # (B, C, height)

    # ---- Pass 2: weighted sum over branches, tiled over HW ----
    wsum_kernel = functools.partial(_weighted_sum_kernel, height=height)
    out = pl.pallas_call(
        wsum_kernel,
        out_shape=jax.ShapeDtypeStruct((B, C, HW), dtype),
        grid_spec=pltpu.PrefetchScalarGridSpec(
            num_scalar_prefetch=0,
            grid=(B, n_t),
            in_specs=(
                [pl.BlockSpec((1, C, height), lambda b, t: (b, 0, 0))]
                + [pl.BlockSpec((1, C, tile), lambda b, t: (b, 0, t))
                   for _ in range(height)]),
            out_specs=pl.BlockSpec((1, C, tile), lambda b, t: (b, 0, t)),
        ),
        compiler_params=pltpu.CompilerParams(
            dimension_semantics=("parallel", "parallel"),
            vmem_limit_bytes=vmem_limit),
    )(attn_t, *xs)

    return out.reshape(B, C, H, W)


def skfusion_ref(in_feats, w1, w2):
    """Pure-JAX reference mirroring the PyTorch forward."""
    B, C, H, W = in_feats[0].shape
    x = jnp.stack(in_feats, axis=1)                 # (B, height, C, H, W)
    feats_sum = jnp.sum(x, axis=1)                  # (B, C, H, W)
    pooled = jnp.mean(feats_sum, axis=(2, 3))       # (B, C)
    hidden = jax.nn.relu(pooled @ w1.T)             # (B, d)
    attn = hidden @ w2.T                            # (B, height*C)
    attn = jax.nn.softmax(attn.reshape(B, x.shape[1], C), axis=1)
    out = jnp.sum(x * attn[:, :, :, None, None], axis=1)
    return out


if __name__ == "__main__":
    # module hyper-params
    dim = 8            # channels C
    height = 2
    reduction = 8
    d = max(int(dim / reduction), 4)   # -> 4

    B, C, H, W = 2, dim, 16, 16

    key = jax.random.PRNGKey(0)
    k1, k2, k3, k4 = jax.random.split(key, 4)

    # two input branches (PyTorch passes a list of feature maps)
    feat0 = jax.random.normal(k1, (B, C, H, W), dtype=jnp.float32)
    feat1 = jax.random.normal(k2, (B, C, H, W), dtype=jnp.float32)

    # deterministic synthetic weights for the two bias-free 1x1 convs
    # Conv2d(dim, d, 1)        -> weight (d, dim)
    # Conv2d(d, dim*height, 1) -> weight (dim*height, d)
    w1 = 0.1 * jax.random.normal(k3, (d, dim), dtype=jnp.float32)
    w2 = 0.1 * jax.random.normal(k4, (dim * height, d), dtype=jnp.float32)

    out = skfusion_pallas([feat0, feat1], w1, w2)
    out = jax.block_until_ready(out)

    ref = skfusion_ref([feat0, feat1], w1, w2)
    assert out.shape == (B, C, H, W)
    assert jnp.allclose(out, ref, atol=1e-5, rtol=1e-5), (
        f"max err {jnp.max(jnp.abs(out - ref))}")

    print("KERNEL_OK")
</pallas_src>

<mosaic_0001>
module attributes {stable_mosaic.version = 11 : i64} {
  func.func @_pool_sum_kernel(%arg0: i32, %arg1: i32, %arg2: memref<1x8x256xf32, #tpu.memory_space<vmem>>, %arg3: memref<1x8x256xf32, #tpu.memory_space<vmem>>, %arg4: memref<1x8x1xf32, #tpu.memory_space<vmem>>) attributes {dimension_semantics = [#tpu.dimension_semantics<parallel>, #tpu.dimension_semantics<arbitrary>], iteration_bounds = array<i64: 2, 1>, scalar_prefetch = 0 : i64, scratch_operands = 0 : i64, tpu.core_type = #tpu.core_type<tc>, window_params = [{transform_indices = @transform_0, window_bounds = array<i64: 1, 8, 256>}, {transform_indices = @transform_1, window_bounds = array<i64: 1, 8, 256>}, {transform_indices = @transform_2, window_bounds = array<i64: 1, 8, 1>}]} {
    %c0_i32 = arith.constant 0 : i32
    %0 = arith.cmpi eq, %arg1, %c0_i32 : i32
    %1 = arith.extui %0 : i1 to i32
    %c0_i32_0 = arith.constant 0 : i32
    %2 = arith.cmpi ne, %1, %c0_i32_0 : i32
    scf.if %2 {
      %cst_16 = arith.constant 0.000000e+00 : f32
      %23 = vector.broadcast %cst_16 : f32 to vector<1x8x1xf32>
      %c0_17 = arith.constant 0 : index
      %c0_18 = arith.constant 0 : index
      %c0_19 = arith.constant 0 : index
      %24 = vector.load %arg4[%c0_17, %c0_18, %c0_19] : memref<1x8x1xf32, #tpu.memory_space<vmem>>, vector<1x8x1xf32>
      tpu.vector_store %arg4[%c0_17, %c0_18, %c0_19], %23 {strides = array<i32>} : memref<1x8x1xf32, #tpu.memory_space<vmem>>, vector<1x8x1xf32>,
    } else {
    }
    %cst = arith.constant 0.000000e+00 : f32
    %3 = vector.broadcast %cst : f32 to vector<8x1xf32>
    %c0 = arith.constant 0 : index
    %c0_1 = arith.constant 0 : index
    %c0_2 = arith.constant 0 : index
    %4 = vector.load %arg2[%c0, %c0_1, %c0_2] : memref<1x8x256xf32, #tpu.memory_space<vmem>>, vector<1x8x256xf32>
    %5 = vector.shape_cast %4 : vector<1x8x256xf32> to vector<8x256xf32>
    %cst_3 = arith.constant dense<0.000000e+00> : vector<8xf32>
    %6 = vector.multi_reduction <add>, %5, %cst_3 [1] : vector<8x256xf32> to vector<8xf32>
    %7 = vector.shape_cast %6 : vector<8xf32> to vector<8x1xf32>
    %8 = arith.addf %3, %7 : vector<8x1xf32>
    %c0_4 = arith.constant 0 : index
    %c0_5 = arith.constant 0 : index
    %c0_6 = arith.constant 0 : index
    %9 = vector.load %arg3[%c0_4, %c0_5, %c0_6] : memref<1x8x256xf32, #tpu.memory_space<vmem>>, vector<1x8x256xf32>
    %10 = vector.shape_cast %9 : vector<1x8x256xf32> to vector<8x256xf32>
    %cst_7 = arith.constant dense<0.000000e+00> : vector<8xf32>
    %11 = vector.multi_reduction <add>, %10, %cst_7 [1] : vector<8x256xf32> to vector<8xf32>
    %12 = vector.shape_cast %11 : vector<8xf32> to vector<8x1xf32>
    %13 = arith.addf %8, %12 : vector<8x1xf32>
    %c0_8 = arith.constant 0 : index
    %c0_9 = arith.constant 0 : index
    %c0_10 = arith.constant 0 : index
    %14 = vector.load %arg4[%c0_8, %c0_9, %c0_10] : memref<1x8x1xf32, #tpu.memory_space<vmem>>, vector<1x8x1xf32>
    %15 = vector.shape_cast %14 : vector<1x8x1xf32> to vector<8x1xf32>
    %16 = arith.addf %15, %13 : vector<8x1xf32>
    %c0_11 = arith.constant 0 : index
    %c0_12 = arith.constant 0 : index
    %c0_13 = arith.constant 0 : index
    %17 = vector.load %arg4[%c0_11, %c0_12, %c0_13] : memref<1x8x1xf32, #tpu.memory_space<vmem>>, vector<1x8x1xf32>
    %18 = vector.shape_cast %17 : vector<1x8x1xf32> to vector<8x1xf32>
    %19 = vector.shape_cast %16 : vector<8x1xf32> to vector<1x8x1xf32>
    tpu.vector_store %arg4[%c0_11, %c0_12, %c0_13], %19 {strides = array<i32>} : memref<1x8x1xf32, #tpu.memory_space<vmem>>, vector<1x8x1xf32>,
    %c0_i32_14 = arith.constant 0 : i32
    %20 = arith.cmpi eq, %arg1, %c0_i32_14 : i32
    %21 = arith.extui %20 : i1 to i32
    %c0_i32_15 = arith.constant 0 : i32
    %22 = arith.cmpi ne, %21, %c0_i32_15 : i32
    scf.if %22 {
      %c0_16 = arith.constant 0 : index
      %c0_17 = arith.constant 0 : index
      %c0_18 = arith.constant 0 : index
      %23 = vector.load %arg4[%c0_16, %c0_17, %c0_18] : memref<1x8x1xf32, #tpu.memory_space<vmem>>, vector<1x8x1xf32>
      %cst_19 = arith.constant 3.906250e-03 : f32
      %24 = vector.broadcast %cst_19 : f32 to vector<1x8x1xf32>
      %25 = arith.mulf %23, %24 : vector<1x8x1xf32>
      %c0_20 = arith.constant 0 : index
      %c0_21 = arith.constant 0 : index
      %c0_22 = arith.constant 0 : index
      %26 = vector.load %arg4[%c0_20, %c0_21, %c0_22] : memref<1x8x1xf32, #tpu.memory_space<vmem>>, vector<1x8x1xf32>
      tpu.vector_store %arg4[%c0_20, %c0_21, %c0_22], %25 {strides = array<i32>} : memref<1x8x1xf32, #tpu.memory_space<vmem>>, vector<1x8x1xf32>,
    } else {
    }
    return
  }
  func.func @transform_0(%arg0: i32, %arg1: i32) -> (i32, i32, i32) {
    %c0_i32 = arith.constant 0 : i32
    %c0_i32_0 = arith.constant 0 : i32
    return %arg0, %c0_i32, %arg1 : i32, i32, i32
  }
  func.func @transform_1(%arg0: i32, %arg1: i32) -> (i32, i32, i32) {
    %c0_i32 = arith.constant 0 : i32
    %c0_i32_0 = arith.constant 0 : i32
    return %arg0, %c0_i32, %arg1 : i32, i32, i32
  }
  func.func @transform_2(%arg0: i32, %arg1: i32) -> (i32, i32, i32) {
    %c0_i32 = arith.constant 0 : i32
    %c0_i32_0 = arith.constant 0 : i32
    %c0_i32_1 = arith.constant 0 : i32
    return %arg0, %c0_i32, %c0_i32_0 : i32, i32, i32
  }
}

</mosaic_0001>

<llo_original>
// kernel: tpu_custom_call.1
$region0: #{tpu_custom_call.1}
  #allocation0 [shape = 'u32[]', space=smem, size = 0x4, offset = 0x4, fixed_abs, tag = 'smem constant byte address 0x4 - core index']
  #allocation1 [shape = 'u32[144,128]{1,0:T(1,128)}', space=vmem, size = 0x12000, scoped, tag = 'internal scratch']
  %s0 = inlined_call_operand.hbm [shape: f32[2,8,256], index: 0, kind: input, shape index: {}]
  %s1 = inlined_call_operand.hbm [shape: f32[2,8,256], index: 1, kind: input, shape index: {}]
  %s2 = inlined_call_operand.vmem [shape: f32[2,8,1], index: 2, kind: output, shape index: {}]
  %s3 = sld [smem:[#allocation0]]
  $region57: #{tpu_custom_call.1} parent=0
    _
  %s5 = ssub.s32 1, %s3
  %s6 = scalar_select 0, %s5, %s3
  $region1: #{tpu_custom_call.1} parent=0
    #allocation2 [shape = 'u8[16384]{0}', space=vmem, size = 0x4000, scoped, tag = 'input window, operand 0']
    #allocation3 [shape = 's32[2]{0}', space=sflag, size = 0x8, scoped, tag = 'scoped memory for tpu_custom_call.1']
    #allocation4 [shape = 'u8[16384]{0}', space=vmem, size = 0x4000, scoped, tag = 'input window, operand 1']
    #allocation5 [shape = 's32[2]{0}', space=sflag, size = 0x8, scoped, tag = 'scoped memory for tpu_custom_call.1']
    %7 = vsyncpa [#allocation3], 0
    %s8 = scalar_lea.sflag [#allocation3], 1
    %9 = vsyncpa %s8, 0
    %10 = vsyncpa [#allocation5], 0
    %s11 = scalar_lea.sflag [#allocation5], 1
    %12 = vsyncpa %s11, 0
    loop: start=0, step=1, limit=4
    $region2: #{tpu_custom_call.1} parent=1 // loop_pre_header
      _
    $region3: #{tpu_custom_call.1} parent=1 // loop_header
      %s14 = sphi 0, %s18
      %p15 = scmp.ge.s32.totalorder %s14, 4
      %s21 = sphi 0, %s33
      %s22 = sphi 0, %s29
      %s23 = sphi 0, %s21
      %s24 = sphi 0, %s22
      %s25 = sphi 0, %s23
      %s26 = sphi 0, %s24
      %s38 = sphi 0, %s40
      %s41 = sphi 0, %s38
      %s42 = sphi 0, %s41
      %s58 = sphi 0, %s42
      %s66 = sphi 0, %s68
      %s69 = sphi 0, %s66
      %s70 = sphi 0, %s69
      %s86 = sphi 0, %s70
      %s92 = sphi 0, %s94
      %s95 = sphi 0, %s92
      %s96 = sphi 0, %s95
      %s112 = sphi 0, %s96
    $region4: #{tpu_custom_call.1} parent=1 // loop_header_branch
      %17 = sbr.rel (%p15) target = $region8
    $region5: #{tpu_custom_call.1} parent=1 // loop_body
      %s19 = ssub.s32 %s14, 1
      %s20 = ssub.s32 %s14, 2
      %s27 = sadd.s32 1, %s22
      %p28 = scmp.ge.s32.totalorder %s27, 1
      %s29 = scalar_select %p28, 0, %s27
      %s30 = sadd.s32 1, %s21
      %s31 = scalar_select %p28, %s30, %s21
      %p32 = scmp.ge.s32.totalorder %s31, 2
      %s33 = scalar_select %p32, 0, %s31
      %s34 = ssub.s32 %s21, %s33
      %s35 = ssub.s32 %s22, %s29
      %s36 = sor.u32 %s34, %s35
      %p37 = scmp.eq.s32.totalorder %s36, 0
      %s39 = sadd.s32 %s38, 1
      %s40 = scalar_select %p37, %s38, %s39
      %p43 = pneg %p37
      %p44 = scmp.eq.s32.totalorder %s14, 1
      %p45 = por %p43, %p44
      %p46 = scmp.ne.s32.totalorder %s38, %s41
      %p47 = scmp.eq.s32.totalorder %s14, 0
      %p48 = por %p46, %p47
      %p49 = scmp.ne.s32.totalorder %s38, %s41
      %p50 = scmp.eq.s32.totalorder %s19, 1
      %p51 = por %p49, %p50
      %p52 = scmp.ne.s32.totalorder %s41, %s42
      %p53 = scmp.eq.s32.totalorder %s19, 0
      %p54 = por %p52, %p53
      %p55 = scmp.ne.s32.totalorder %s41, %s42
      %p56 = scmp.eq.s32.totalorder %s20, 1
      %p57 = por %p55, %p56
      %p59 = scmp.ne.s32.totalorder %s42, %s58
      %p60 = scmp.eq.s32.totalorder %s20, 0
      %p61 = por %p59, %p60
      %s62 = ssub.s32 %s21, %s33
      %s63 = ssub.s32 %s22, %s29
      %s64 = sor.u32 %s62, %s63
      %p65 = scmp.eq.s32.totalorder %s64, 0
      %s67 = sadd.s32 %s66, 1
      %s68 = scalar_select %p65, %s66, %s67
      %p71 = pneg %p65
      %p72 = scmp.eq.s32.totalorder %s14, 1
      %p73 = por %p71, %p72
      %p74 = scmp.ne.s32.totalorder %s66, %s69
      %p75 = scmp.eq.s32.totalorder %s14, 0
      %p76 = por %p74, %p75
      %p77 = scmp.ne.s32.totalorder %s66, %s69
      %p78 = scmp.eq.s32.totalorder %s19, 1
      %p79 = por %p77, %p78
      %p80 = scmp.ne.s32.totalorder %s69, %s70
      %p81 = scmp.eq.s32.totalorder %s19, 0
      %p82 = por %p80, %p81
      %p83 = scmp.ne.s32.totalorder %s69, %s70
      %p84 = scmp.eq.s32.totalorder %s20, 1
      %p85 = por %p83, %p84
      %p87 = scmp.ne.s32.totalorder %s70, %s86
      %p88 = scmp.eq.s32.totalorder %s20, 0
      %p89 = por %p87, %p88
      %s90 = ssub.s32 %s21, %s33
      %p91 = scmp.eq.s32.totalorder %s90, 0
      %s93 = sadd.s32 %s92, 1
      %s94 = scalar_select %p91, %s92, %s93
      %p97 = pneg %p91
      %p98 = scmp.eq.s32.totalorder %s14, 1
      %p99 = por %p97, %p98
      %p100 = scmp.ne.s32.totalorder %s92, %s95
      %p101 = scmp.eq.s32.totalorder %s14, 0
      %p102 = por %p100, %p101
      %p103 = scmp.ne.s32.totalorder %s92, %s95
      %p104 = scmp.eq.s32.totalorder %s19, 1
      %p105 = por %p103, %p104
      %p106 = scmp.ne.s32.totalorder %s95, %s96
      %p107 = scmp.eq.s32.totalorder %s19, 0
      %p108 = por %p106, %p107
      %p109 = scmp.ne.s32.totalorder %s95, %s96
      %p110 = scmp.eq.s32.totalorder %s20, 1
      %p111 = por %p109, %p110
      %p113 = scmp.ne.s32.totalorder %s96, %s112
      %p114 = scmp.eq.s32.totalorder %s20, 0
      %p115 = por %p113, %p114
      %p116 = scmp.le.s32.totalorder 1, %s14
      %p117 = scmp.lt.s32.totalorder %s14, 3
      %p118 = pnand %p116, %p117
      %p119 = pneg %p118
      // Predicated region
      $region9: #{tpu_custom_call.1} parent=5 // pred_check
        _
      $region10: #{tpu_custom_call.1} parent=5 // pred_check_branch
        %121 = sbr.rel (%p118) target = $region12
      $region11: #{tpu_custom_call.1} parent=5 // pred_region
        %s122 = ssub.s32 %s14, 1
      $region12: #{tpu_custom_call.1} parent=5 // pred_fallthru
        _
      %p123 = scmp.lt.s32.totalorder %s14, 2
      // Predicated region
      $region13: #{tpu_custom_call.1} parent=5 // pred_check
        %p124 = pneg %p123
      $region14: #{tpu_custom_call.1} parent=5 // pred_check_branch
        %126 = sbr.rel (%p124) target = $region16
      $region15: #{tpu_custom_call.1} parent=5 // pred_region
        // Predicated region
        $region17: #{tpu_custom_call.1} parent=15 // pred_check
          %p127 = pneg %p48
        $region18: #{tpu_custom_call.1} parent=15 // pred_check_branch
          %129 = sbr.rel (%p127) target = $region20
        $region19: #{tpu_custom_call.1} parent=15 // pred_region
          %s130 = sand.u32 %s38, 1
          %s131 = scalar_lea.sflag [#allocation3], %s130
          %s132 = sand.u32 %s38, 1
          %s133 = smul.addr %s132, 16
          %s134 = scalar_lea.vmem [#allocation2], %s133
          %s135 = smul.u32 2, %s22
          %s137 = ssub.s32 256, 256
          %138 = vsyncadd %s131, %s137
          %s139 = smul.addr %s21, 2
          %s140 = sadd.s32 %s135, %s139
          %s141 = smul.addr %s140, 128
          %s142 = scalar_lea.hbm %s0, %s141
          %s144 = sshll.u32 %s134, 4
          %s145 = int_to_ptr.vmem [resolvable:$true] %s144
          %147 = dma.hbm_to_vmem [thread:$0]  %s142, 256, %s145, %s131
        $region20: #{tpu_custom_call.1} parent=15 // pred_fallthru
          _
        // Predicated region
        $region21: #{tpu_custom_call.1} parent=15 // pred_check
          %p148 = pneg %p76
        $region22: #{tpu_custom_call.1} parent=15 // pred_check_branch
          %150 = sbr.rel (%p148) target = $region24
        $region23: #{tpu_custom_call.1} parent=15 // pred_region
          %s151 = sand.u32 %s66, 1
          %s152 = scalar_lea.sflag [#allocation5], %s151
          %s153 = sand.u32 %s66, 1
          %s154 = smul.addr %s153, 16
          %s155 = scalar_lea.vmem [#allocation4], %s154
          %s156 = smul.u32 2, %s22
          %s158 = ssub.s32 256, 256
          %159 = vsyncadd %s152, %s158
          %s160 = smul.addr %s21, 2
          %s161 = sadd.s32 %s156, %s160
          %s162 = smul.addr %s161, 128
          %s163 = scalar_lea.hbm %s1, %s162
          %s165 = sshll.u32 %s155, 4
          %s166 = int_to_ptr.vmem [resolvable:$true] %s165
          %168 = dma.hbm_to_vmem [thread:$0]  %s163, 256, %s166, %s152
        $region24: #{tpu_custom_call.1} parent=15 // pred_fallthru
          _
      $region16: #{tpu_custom_call.1} parent=5 // pred_fallthru
        _
      %p169 = scmp.le.s32.totalorder 1, %s14
      %p170 = scmp.lt.s32.totalorder %s14, 3
      %p171 = pnand %p169, %p170
      %p172 = pneg %p171
      // Predicated region
      $region25: #{tpu_custom_call.1} parent=5 // pred_check
        _
      $region26: #{tpu_custom_call.1} parent=5 // pred_check_branch
        %174 = sbr.rel (%p171) target = $region28
      $region27: #{tpu_custom_call.1} parent=5 // pred_region
        %s175 = ssub.s32 %s14, 1
        %s176 = sand.u32 %s41, 1
        %s177 = scalar_lea.sflag [#allocation3], %s176
        %s178 = sand.u32 %s41, 1
        %s179 = smul.addr %s178, 16
        %s180 = scalar_lea.vmem [#allocation2], %s179
        // Predicated region
        $region29: #{tpu_custom_call.1} parent=27 // pred_check
          %p181 = pneg %p54
        $region30: #{tpu_custom_call.1} parent=27 // pred_check_branch
          %183 = sbr.rel (%p181) target = $region32
        $region31: #{tpu_custom_call.1} parent=27 // pred_region
          %184 = dma.done %s177, 256
        $region32: #{tpu_custom_call.1} parent=27 // pred_fallthru
          _
        %s185 = sand.u32 %s69, 1
        %s186 = scalar_lea.sflag [#allocation5], %s185
        %s187 = sand.u32 %s69, 1
        %s188 = smul.addr %s187, 16
        %s189 = scalar_lea.vmem [#allocation4], %s188
        // Predicated region
        $region33: #{tpu_custom_call.1} parent=27 // pred_check
          %p190 = pneg %p82
        $region34: #{tpu_custom_call.1} parent=27 // pred_check_branch
          %192 = sbr.rel (%p190) target = $region36
        $region35: #{tpu_custom_call.1} parent=27 // pred_region
          %193 = dma.done %s186, 256
        $region36: #{tpu_custom_call.1} parent=27 // pred_fallthru
          _
        %s194 = sand.u32 %s41, 1
        %s195 = scalar_lea.sflag [#allocation3], %s194
        %s196 = sand.u32 %s41, 1
        %s197 = smul.addr %s196, 16
        %s198 = scalar_lea.vmem [#allocation2], %s197
        %p199 = pneg %p54
        %p200 = pneg %p51
        %s201 = sand.u32 %s69, 1
        %s202 = scalar_lea.sflag [#allocation5], %s201
        %s203 = sand.u32 %s69, 1
        %s204 = smul.addr %s203, 16
        %s205 = scalar_lea.vmem [#allocation4], %s204
        %p206 = pneg %p82
        %p207 = pneg %p79
        %p208 = pneg %p108
        %p209 = pneg %p105
        %p210 = scmp.lt.s32.totalorder %s23, 1
        %s211 = scalar_select %p210, %s23, 1
        %s212 = smul.addr %s211, 8
        %s213 = scalar_lea.vmem %s2, %s212
        %s214 = smul.u32 2, %s24
        %s215 = smul.u32 2, %s24
        %p216 = scmp.lt.s32.totalorder %s23, 1
        %s217 = scalar_select %p216, %s23, 1
        %s218 = smul.addr %s217, 8
        %s219 = scalar_lea.vmem %s2, %s218
        %p220 = scmp.eq.s32.totalorder %s24, 0
        // Predicated region
        $region37: #{tpu_custom_call.1} parent=27 // pred_check
          %p221 = pneg %p220
        $region38: #{tpu_custom_call.1} parent=27 // pred_check_branch
          %223 = sbr.rel (%p221) target = $region40
        $region39: #{tpu_custom_call.1} parent=27 // pred_region
          %vm224 = vcmask 7168
          %225 = vst.msk [vmem:[%s219] sm:$0xff] %vm224, 0.0
        $region40: #{tpu_custom_call.1} parent=27 // pred_fallthru
          _
        %v226 = vld [vmem:[%s180] sm:$0xff]
        %v227 = vld [vmem:[%s180 + $0x8] sm:$0xff]
        %v228 = vadd.f32 %v226, %v227
        %229 = vadd.xlane.f32.xlu0 %v228
        %v230 = vpop.xlane.xlu0 %229
        %v231 = vadd.f32 %v230, 0.0
        %v232 = vld [vmem:[%s189] sm:$0xff]
        %v233 = vld [vmem:[%s189 + $0x8] sm:$0xff]
        %v234 = vadd.f32 %v232, %v233
        %235 = vadd.xlane.f32.xlu0 %v234
        %v236 = vpop.xlane.xlu0 %235
        %v237 = vadd.f32 %v231, %v236
        %v238 = vld [vmem:[%s219] sm:$0xff]
        %v239 = vadd.f32 %v238, %v237
        %vm240 = vcmask 7168
        %241 = vst.msk [vmem:[%s219] sm:$0xff] %vm240, %v239
        // Predicated region
        $region41: #{tpu_custom_call.1} parent=27 // pred_check
          %p242 = pneg %p220
        $region42: #{tpu_custom_call.1} parent=27 // pred_check_branch
          %244 = sbr.rel (%p242) target = $region44
        $region43: #{tpu_custom_call.1} parent=27 // pred_region
          %v245 = vld [vmem:[%s219] sm:$0xff]
          %v246 = vmul.f32 %v245, 0.00390625
          %247 = vst.msk [vmem:[%s219] sm:$0xff] %vm240, %v246
        $region44: #{tpu_custom_call.1} parent=27 // pred_fallthru
          _
        %p248 = scmp.lt.s32.totalorder %s23, 1
        %s249 = scalar_select %p248, %s23, 1
        %s250 = smul.addr %s249, 8
        %s251 = scalar_lea.vmem %s2, %s250
        // Predicated region
        $region45: #{tpu_custom_call.1} parent=27 // pred_check
          %p252 = pneg %p105
        $region46: #{tpu_custom_call.1} parent=27 // pred_check_branch
          %254 = sbr.rel (%p252) target = $region48
        $region47: #{tpu_custom_call.1} parent=27 // pred_region
          _
        $region48: #{tpu_custom_call.1} parent=27 // pred_fallthru
          _
      $region28: #{tpu_custom_call.1} parent=5 // pred_fallthru
        _
      %p255 = scmp.le.s32.totalorder 2, %s14
      // Predicated region
      $region49: #{tpu_custom_call.1} parent=5 // pred_check
        %p256 = pneg %p255
      $region50: #{tpu_custom_call.1} parent=5 // pred_check_branch
        %258 = sbr.rel (%p256) target = $region52
      $region51: #{tpu_custom_call.1} parent=5 // pred_region
        %s259 = ssub.s32 %s14, 2
        // Predicated region
        $region53: #{tpu_custom_call.1} parent=51 // pred_check
          %p260 = pneg %p111
        $region54: #{tpu_custom_call.1} parent=51 // pred_check_branch
          %262 = sbr.rel (%p260) target = $region56
        $region55: #{tpu_custom_call.1} parent=51 // pred_region
          %p263 = scmp.lt.s32.totalorder %s25, 1
          %s264 = scalar_select %p263, %s25, 1
          %s265 = smul.addr %s264, 8
          %s266 = scalar_lea.vmem %s2, %s265
        $region56: #{tpu_custom_call.1} parent=51 // pred_fallthru
          _
      $region52: #{tpu_custom_call.1} parent=5 // pred_fallthru
        _
    $region6: #{tpu_custom_call.1} parent=1 // loop_footer
      %s18 = sadd.s32 1, %s14
    $region7: #{tpu_custom_call.1} parent=1 // loop_footer_branch
      %13 = sbr.rel target = $region3
    $region8: #{tpu_custom_call.1} parent=1 // loop_exit
      _
    %267 = vsyncpa [#allocation3], 1
    %s268 = scalar_lea.sflag [#allocation3], 1
    %269 = vsyncpa %s268, 1
    %270 = vsyncpa [#allocation5], 1
    %s271 = scalar_lea.sflag [#allocation5], 1
    %272 = vsyncpa %s271, 1

</llo_original>
